<compile_context>
chip_gen: v5e
topology: v5e:2x2
jax: 0.10.0
libtpu: 0.0.40
codegen_flags: <defaults>
</compile_context>

<pallas_src>
import jax
import jax.numpy as jnp
from jax.experimental import pallas as pl
from jax.experimental.pallas import tpu as pltpu


def _cam2head_loss_kernel(xt_ref, wt_ref, out_ref):
    # p[r, i], r<3 : 10/(3N) * ( mapped_t[i] @ m0[:, :3] - head_t[i] @ h0[:, :3] )[r]
    # p[3, i]      : 5/N     * ( mapped_z[i] - head_z[i] )
    p = jnp.dot(wt_ref[...], xt_ref[...],
                preferred_element_type=jnp.float32)            # (4, N)

    # Localize rows 0..2 to frame 0; the height row (3) is NOT localized.
    seq0 = p[:, 0:1]                                           # frame-0 column
    row = jax.lax.broadcasted_iota(jnp.int32, p.shape, 0)      # (4, N)
    d = jnp.where(row < 3, p - seq0, p)

    # Fused weighted L1: loss weights were folded into wt, so just sum |d|.
    out_ref[0, 0] = jnp.sum(jnp.abs(d))


def cam2head_optim_forward(cam_seq, head_seq, cam2head_R, translation):
    """Pallas equivalent of Cam2HeadOptim.forward().

    cam_seq, head_seq: (N, 4, 4) f32 SE(3) sequences.
    cam2head_R: (3, 3) f32 rotation.   translation: (3,) f32 parameter.
    Returns a scalar f32 loss (trans_loss * 10 + height_loss * 5).
    """
    cam_seq = cam_seq.astype(jnp.float32)
    head_seq = head_seq.astype(jnp.float32)
    n = cam_seq.shape[0]

    # get_current_cam2head() -- parameter setup stays in plain JAX.
    c_mat = jnp.eye(4, dtype=jnp.float32)
    c_mat = c_mat.at[:3, :3].set(cam2head_R.astype(jnp.float32))
    c_mat = c_mat.at[:3, 3].set(translation.astype(jnp.float32))

    # ---- fold all N-independent linear algebra into one (4, 20) weight ----
    # mapped_t[i] = (cam_seq[i] @ c_mat)[:, 3] = w_sel^T @ flatten(cam_seq[i])
    w_sel = jnp.kron(jnp.eye(4, dtype=jnp.float32), c_mat[:, 3:4])    # (16, 4)
    m0 = cam_seq[0] @ c_mat                                           # mapped_head[0]
    h0 = head_seq[0]
    e2 = jnp.zeros((4, 1), jnp.float32).at[2, 0].set(1.0)             # z selector
    m_cols = jnp.concatenate([m0[:, :3], e2], axis=1)                 # (4, 4)
    h_cols = jnp.concatenate([h0[:, :3], e2], axis=1)                 # (4, 4)
    w = jnp.concatenate([w_sel @ m_cols, -h_cols], axis=0)            # (20, 4)
    # nn.L1Loss(mean) weights: 10/(3N) for the 3 translation rows, 5/N height.
    loss_w = jnp.array([10.0 / (3.0 * n)] * 3 + [5.0 / n], jnp.float32)
    wt = (w * loss_w[None, :]).T                                      # (4, 20)

    # ---- lane-dense per-frame data: sequence index on the lane axis --------
    xt = jnp.concatenate([cam_seq.reshape(n, 16),                     # rows 0-15
                          head_seq[:, :, 3]], axis=1).T               # rows 16-19 -> (20, N)

    out = pl.pallas_call(
        _cam2head_loss_kernel,
        out_shape=jax.ShapeDtypeStruct((1, 1), jnp.float32),
        in_specs=[pl.BlockSpec(memory_space=pltpu.MemorySpace.VMEM),
                  pl.BlockSpec(memory_space=pltpu.MemorySpace.VMEM)],
        out_specs=pl.BlockSpec(memory_space=pltpu.MemorySpace.SMEM),
    )(xt, wt)
    return out[0, 0]


# ---------------- pure-JAX reference (mirrors the PyTorch module) -------------

def _invert_T(T):
    r = T[:, :3, :3]
    t = T[:, :3, 3:]
    r_inv = jnp.swapaxes(r, 1, 2)
    t_inv = -r_inv @ t
    bottom = jnp.broadcast_to(jnp.array([0.0, 0.0, 0.0, 1.0], jnp.float32),
                              (T.shape[0], 1, 4))
    return jnp.concatenate([jnp.concatenate([r_inv, t_inv], axis=2), bottom], axis=1)


def _forward_ref(cam_seq, head_seq, R, trans):
    c = jnp.eye(4, dtype=jnp.float32).at[:3, :3].set(R).at[:3, 3].set(trans)
    mapped = cam_seq @ c[None]
    loc_m = _invert_T(mapped[0:1]) @ mapped
    loc_h = _invert_T(head_seq[0:1]) @ head_seq
    trans_loss = jnp.mean(jnp.abs(loc_m[:, :3, 3] - loc_h[:, :3, 3]))
    height_loss = jnp.mean(jnp.abs(mapped[:, 2, 3] - head_seq[:, 2, 3]))
    return trans_loss * 10.0 + height_loss * 5.0


# ---------------- deterministic synthetic inputs ------------------------------

def _euler_T(key, n):
    ka, kt = jax.random.split(key)
    ang = jax.random.uniform(ka, (n, 3), minval=-1.0, maxval=1.0, dtype=jnp.float32)
    trn = jax.random.uniform(kt, (n, 3), minval=-0.5, maxval=0.5, dtype=jnp.float32)
    a, b, c = ang[:, 0], ang[:, 1], ang[:, 2]
    z = jnp.zeros_like(a)
    o = jnp.ones_like(a)
    rz = jnp.stack([jnp.stack([jnp.cos(a), -jnp.sin(a), z], -1),
                    jnp.stack([jnp.sin(a), jnp.cos(a), z], -1),
                    jnp.stack([z, z, o], -1)], -2)
    ry = jnp.stack([jnp.stack([jnp.cos(b), z, jnp.sin(b)], -1),
                    jnp.stack([z, o, z], -1),
                    jnp.stack([-jnp.sin(b), z, jnp.cos(b)], -1)], -2)
    rx = jnp.stack([jnp.stack([o, z, z], -1),
                    jnp.stack([z, jnp.cos(c), -jnp.sin(c)], -1),
                    jnp.stack([z, jnp.sin(c), jnp.cos(c)], -1)], -2)
    rot = rz @ ry @ rx
    t_mat = jnp.tile(jnp.eye(4, dtype=jnp.float32)[None], (n, 1, 1))
    t_mat = t_mat.at[:, :3, :3].set(rot)
    t_mat = t_mat.at[:, :3, 3].set(trn)
    return t_mat


if __name__ == "__main__":
    key = jax.random.PRNGKey(0)
    k_cam, k_head, k_rot, k_trans = jax.random.split(key, 4)
    N = 8  # sequence length

    cam_rotate_seq = _euler_T(k_cam, N)                 # (N, 4, 4)
    head_rotate_seq = _euler_T(k_head, N)               # (N, 4, 4)
    cam2head_R = _euler_T(k_rot, 1)[0, :3, :3]          # (3, 3) rotation
    translation = jax.random.uniform(k_trans, (3,), dtype=jnp.float32)  # nn.Parameter(torch.rand(3))

    loss = cam2head_optim_forward(cam_rotate_seq, head_rotate_seq, cam2head_R, translation)
    loss = jax.block_until_ready(loss)

    ref = _forward_ref(cam_rotate_seq, head_rotate_seq, cam2head_R, translation)
    assert abs(float(loss) - float(ref)) < 1e-4 + 1e-3 * abs(float(ref)), (float(loss), float(ref))

    print("KERNEL_OK")
</pallas_src>

<mosaic_0001>
module attributes {stable_mosaic.version = 11 : i64} {
  func.func @_cam2head_loss_kernel(%arg0: memref<20x8xf32, #tpu.memory_space<vmem>>, %arg1: memref<4x20xf32, #tpu.memory_space<vmem>>, %arg2: memref<1x1xf32, #tpu.memory_space<smem>>) attributes {dimension_semantics = [], scalar_prefetch = 0 : i64, scratch_operands = 0 : i64, tpu.core_type = #tpu.core_type<tc>} {
    %c0 = arith.constant 0 : index
    %c0_0 = arith.constant 0 : index
    %0 = vector.load %arg1[%c0, %c0_0] : memref<4x20xf32, #tpu.memory_space<vmem>>, vector<4x20xf32>
    %c0_1 = arith.constant 0 : index
    %c0_2 = arith.constant 0 : index
    %1 = vector.load %arg0[%c0_1, %c0_2] : memref<20x8xf32, #tpu.memory_space<vmem>>, vector<20x8xf32>
    %cst = arith.constant dense<0.000000e+00> : vector<4x8xf32>
    %2 = tpu.matmul %0, %1, %cst {dimension_numbers = #tpu.dot_dimension_numbers<[1], [0], [0], [1], [0, 0, 1, 1], [], []>} : vector<4x20xf32>, vector<20x8xf32>, vector<4x8xf32> -> vector<4x8xf32>
    %3 = vector.extract_strided_slice %2 {offsets = [0, 0], sizes = [4, 1], strides = [1, 1]} : vector<4x8xf32> to vector<4x1xf32>
    %4 = tpu.iota {dimensions = array<i32: 0>} : vector<4x8xi32>
    %c3_i32 = arith.constant 3 : i32
    %5 = vector.broadcast %c3_i32 : i32 to vector<4x8xi32>
    %6 = arith.cmpi slt, %4, %5 : vector<4x8xi32>
    %7 = vector.broadcast %3 : vector<4x1xf32> to vector<4x8xf32>
    %8 = arith.subf %2, %7 : vector<4x8xf32>
    %9 = arith.select %6, %8, %2 : vector<4x8xi1>, vector<4x8xf32>
    %10 = math.absf %9 : vector<4x8xf32>
    %11 = vector.shape_cast %10 : vector<4x8xf32> to vector<1x4x8xf32>
    %cst_3 = arith.constant dense<0.000000e+00> : vector<1xf32>
    %12 = vector.multi_reduction <add>, %11, %cst_3 [1, 2] : vector<1x4x8xf32> to vector<1xf32>
    %13 = vector.shape_cast %12 : vector<1xf32> to vector<1x1x1xf32>
    %14 = vector.extract %13[0, 0, 0] : f32 from vector<1x1x1xf32>
    %c0_4 = arith.constant 0 : index
    %c0_5 = arith.constant 0 : index
    %15 = memref.load %arg2[%c0_4, %c0_5] : memref<1x1xf32, #tpu.memory_space<smem>>
    memref.store %14, %arg2[%c0_4, %c0_5] : memref<1x1xf32, #tpu.memory_space<smem>>
    return
  }
}

</mosaic_0001>

<llo_original>
// kernel: tpu_custom_call.1
$region0: #{tpu_custom_call.1}
  #allocation0 [shape = 'u32[]', space=smem, size = 0x4, offset = 0x4, fixed_abs, tag = 'smem constant byte address 0x4 - core index']
  #allocation1 [shape = 'u32[72,128]{1,0:T(1,128)}', space=vmem, size = 0x9000, scoped, tag = 'internal scratch']
  %s0 = inlined_call_operand.vmem [shape: f32[20,8], index: 0, kind: input, shape index: {}]
  %s1 = inlined_call_operand.vmem [shape: f32[4,20], index: 1, kind: input, shape index: {}]
  %s2 = inlined_call_operand.hbm [shape: f32[1,1], index: 2, kind: output, shape index: {}]
  %s3 = sld [smem:[#allocation0]]
  $region18: #{tpu_custom_call.1} parent=0
    _
  %s5 = ssub.s32 1, %s3
  %s6 = scalar_select 0, %s5, %s3
  $region1: #{tpu_custom_call.1} parent=0
    #allocation2 [shape = 'u8[512]{0}', space=smem, size = 0x200, scoped, tag = 'output window, operand 0, single buffered']
    #allocation3 [shape = 's32[1]{0}', space=sflag, size = 0x4, scoped, tag = 'scoped memory for tpu_custom_call.1']
    %7 = vsyncpa [#allocation3], 0
    // Predicated region
    $region2: #{tpu_custom_call.1} parent=1 // pred_check
      _
    $region3: #{tpu_custom_call.1} parent=1 // pred_check_branch
      %9 = sbr.rel (0) target = $region5
    $region4: #{tpu_custom_call.1} parent=1 // pred_region
      _
    $region5: #{tpu_custom_call.1} parent=1 // pred_fallthru
      _
    // Predicated region
    $region6: #{tpu_custom_call.1} parent=1 // pred_check
      _
    $region7: #{tpu_custom_call.1} parent=1 // pred_check_branch
      %11 = sbr.rel (0) target = $region9
    $region8: #{tpu_custom_call.1} parent=1 // pred_region
      _
    $region9: #{tpu_custom_call.1} parent=1 // pred_fallthru
      _
    %v12 = vld [vmem:[%s1] sm:$0xf]
    %v13 = vld [vmem:[%s0] sm:$0xff]
    %v14 = vld [vmem:[%s0 + $0x8] sm:$0xff]
    %v15 = vld [vmem:[%s0 + $0x10] sm:$0xf]
    %vm16 = vcmask 162816
    %v18 = vsel %vm16, %v12, 0
    %vm20 = vcmask 1043456
    %v22 = vsel %vm20, %v15, 0
    %24 = vmatpush.msra.mxu0 0.0
    %25 = vmatpush.msra.mxu0 0.0
    %26 = vmatpush.msra.mxu0 0.0
    %27 = vmatpush.msra.mxu0 0.0
    %28 = vmatpush.msra.mxu0 0.0
    %29 = vmatpush.msra.mxu0 0.0
    %30 = vmatpush.msra.mxu0 0.0
    %31 = vmatpush.msra.mxu0 0.0
    %32 = vmatpush.msra.mxu0 0.0
    %33 = vmatpush.msra.mxu0 0.0
    %34 = vmatpush.msra.mxu0 0.0
    %35 = vmatpush.msra.mxu0 0.0
    %36 = vmatpush.msra.mxu0 0.0
    %37 = vmatpush.msra.mxu0 %v22
    %38 = vmatpush.msra.mxu0 %v14
    %39 = vmatpush.msra.mxu0 %v13
    %40 = vmatmul.f32.gmra.mxu0 %v18
    %v41 = vpop.f32.mrf.mxu0
    %v42 = vadd.f32 0.0, %v41
    %43 = vdwg.mxu0
    %v44 = vlaneseq
    %v45 = vshrl.u32 %v44, 7
    %vm46 = vcmp.lt.s32.totalorder %v45, 3
    %48 = vset.pattern.permute.xlu0 0
    %49 = vperm.xlu0 %48, %v42
    %v50 = vpop.permute.xlu0 %49
    %v52 = vsub.f32 %v42, %v50
    %v53 = vsel %vm46, %v52, %v42
    %v54 = vand.u32 2147483647, %v53
    %vm55 = vcmask 60416
    %v56 = vsel %vm55, %v54, 0.0
    %57 = vadd.xlane.f32.xlu0 %v56
    %v58 = vpop.xlane.xlu0 %57
    %v59 = vrot.slane %v58, 4
    %v60 = vadd.f32 %v58, %v59
    %v61 = vrot.slane %v60, 2
    %v62 = vadd.f32 %v60, %v61
    %v63 = vrot.slane %v62, 1
    %v64 = vadd.f32 %v62, %v63
    %s65 = vtos %v64
    %s66 = scalar_lea.smem [#allocation2], 0
    %67 = sst [smem:[%s66]] %s65
    // Predicated region
    $region10: #{tpu_custom_call.1} parent=1 // pred_check
      _
    $region11: #{tpu_custom_call.1} parent=1 // pred_check_branch
      %69 = sbr.rel (0) target = $region13
    $region12: #{tpu_custom_call.1} parent=1 // pred_region
      %71 = vsyncadd [#allocation3], 0
      %s73 = sshll.u32 %s2, 4
      %s74 = int_to_ptr.hbm [resolvable:$true] %s73
      %76 = dma.smem_to_hbm [#allocation2], 16, %s74, [#allocation3]
    $region13: #{tpu_custom_call.1} parent=1 // pred_fallthru
      _
    // Predicated region
    $region14: #{tpu_custom_call.1} parent=1 // pred_check
      _
    $region15: #{tpu_custom_call.1} parent=1 // pred_check_branch
      %78 = sbr.rel (0) target = $region17
    $region16: #{tpu_custom_call.1} parent=1 // pred_region
      %80 = dma.done [#allocation3], 16
    $region17: #{tpu_custom_call.1} parent=1 // pred_fallthru
      _
    %81 = sfence
    %82 = vsyncpa [#allocation3], 1

</llo_original>
